<compile_context>
chip_gen: v5e
topology: v5e:2x2
jax: 0.10.0
libtpu: 0.0.40
codegen_flags: <defaults>
</compile_context>

<pallas_src>
import functools

import jax
import jax.numpy as jnp
from jax.experimental import pallas as pl
from jax.experimental.pallas import tpu as pltpu


def _round_up(n: int, m: int) -> int:
    return ((n + m - 1) // m) * m


@functools.lru_cache(maxsize=None)
def _roll_sign() -> int:
    """Probe pltpu.roll's shift convention once (outside jit) and cache it.

    Returns +1 if pltpu.roll matches jnp.roll (out[i] = in[(i - shift) % N]),
    -1 if it is the opposite convention.  Makes the window-shift helper
    robust to either lowering.
    """
    def probe(x_ref, o_ref):
        o_ref[...] = pltpu.roll(x_ref[...], 1, axis=1)

    x = jnp.broadcast_to(jnp.arange(128, dtype=jnp.float32)[None, :], (8, 128))
    out = pl.pallas_call(
        probe, out_shape=jax.ShapeDtypeStruct((8, 128), jnp.float32)
    )(x)
    # jnp.roll convention puts the last element (127) at position 0.
    return 1 if float(out[0, 0]) == 127.0 else -1


def _vmem_capacity_bytes() -> int:
    """Physical per-core VMEM; conservative fallback if the query fails."""
    try:
        info = pltpu.get_tpu_info()
        cap = getattr(info, "vmem_capacity_bytes", None)
        if cap:
            return int(cap)
    except Exception:
        pass
    return 64 << 20  # v7x per-TensorCore VMEM (smallest current generation)


def _feature_kernel(x_ref, ent_ref, cont_ref, *, k: int, roll_sign: int):
    """Per-window softmax-entropy and mean.

    x_ref:    (TR, Lp)   rows of the (column-padded) signal, Lp % 128 == 0
    ent_ref:  (TR, Wp)   entropy output, Wp % 128 == 0, Wp + k - 1 <= Lp
    cont_ref: (TR, Wp)   mean (content) output
    """
    x = x_ref[...].astype(jnp.float32)            # (TR, Lp)
    wp = ent_ref.shape[-1]                        # static
    inv_k = 1.0 / k

    def shl(a, j: int):
        # a[..., i] -> a[..., (i + j) % lanes]  ("shift left" by j lanes).
        if j == 0:
            return a
        lanes = a.shape[-1]
        return pltpu.roll(a, (-roll_sign * j) % lanes, axis=1)

    # ---- pass 1a: sliding max of width k via doubling (max is idempotent,
    # so the final overlapping combine is valid): O(log k) roll+max steps.
    m = x
    w = 1
    while 2 * w <= k:
        m = jnp.maximum(m, shl(m, w))
        w *= 2
    if w < k:
        m = jnp.maximum(m, shl(m, k - w))
    m = m[:, :wp]                                 # aligned prefix

    # ---- pass 1b: sliding sum of width k via binary decomposition
    # (~2*log2(k) rolls+adds).  Keeps the content accumulator out of the
    # EUP-hot exp loop below (fewer VMEM-resident accumulator streams).
    blk = x          # block sums of width bw (power of two)
    bw = 1
    acc = None
    covered = 0
    rem = k
    while True:
        if rem & 1:
            if acc is None:
                acc, covered = blk, bw
            else:
                acc = acc + shl(blk, covered)
                covered += bw
        rem >>= 1
        if rem == 0:
            break
        blk = blk + shl(blk, bw)
        bw *= 2
    c = acc[:, :wp]

    # ---- pass 2: stream one shifted view per window offset.
    #   z = sum_j exp(s_j - m);  t = sum_j exp(s_j - m) * (s_j - m)
    # Only two accumulators live in this loop; shifted views are aligned
    # prefixes of XLU rolls.
    z = jnp.zeros_like(m)
    t = jnp.zeros_like(m)
    for j in range(k):
        sm = shl(x, j)[:, :wp] - m
        e = jnp.exp(sm)
        z = z + e
        t = t + e * sm

    # sum_j p_j * log p_j = t / z - log z   (p_j = e_j / z); entropy = mean.
    # Approx EUP reciprocal + one Newton refinement -> ~f32-exact.
    inv_z = pl.reciprocal(z, approx=True)
    inv_z = inv_z * (2.0 - z * inv_z)
    ent_ref[...] = ((t * inv_z - jnp.log(z)) * inv_k).astype(ent_ref.dtype)
    cont_ref[...] = (c * inv_k).astype(cont_ref.dtype)


def feature_forward(x: jax.Array, k: int, *, vmem_limit_bytes: int | None = None):
    """x: (B, C, L) -> (entropy (B, C, L-k+1), content (B, C, L-k+1)).

    Call outside jit (it probes the roll convention and sizes tiles eagerly);
    the pallas_call itself is jitted by XLA as usual.
    """
    B, C, L = x.shape
    assert 1 <= k <= L
    W = L - k + 1
    R = B * C

    # Lane-dense layout: pad the window axis AND the signal axis to multiples
    # of 128; extra windows touch only padded zeros and are sliced off after.
    Wp = _round_up(W, 128)
    Lp = _round_up(Wp + k - 1, 128)

    # Generation-aware VMEM sizing: <= ~48 MiB on v7x (64 MiB physical),
    # <= 96 MiB on v5e/v6e (128 MiB physical).
    if vmem_limit_bytes is None:
        vmem_limit_bytes = min((_vmem_capacity_bytes() * 3) // 4, 96 << 20)
    budget = (vmem_limit_bytes * 5) // 8          # headroom for compiler scratch

    isz = jnp.dtype(x.dtype).itemsize
    # Per-row VMEM: double-buffered input + 2 double-buffered outputs, plus
    # live f32 compute temporaries (~4 Lp-wide + ~6 Wp-wide arrays).
    bytes_per_row = isz * (2 * Lp + 4 * Wp) + 4 * (4 * Lp + 6 * Wp)
    tr = max(8, (budget // bytes_per_row) // 8 * 8)

    rows8 = _round_up(R, 8)
    if rows8 >= 16:
        # Keep >= 2 grid steps: v7x's two TensorCores share the "parallel"
        # axis, and the pipeline needs something to overlap.
        tr = min(tr, max(8, (rows8 // 2) // 8 * 8))
    tr = min(tr, rows8)
    Rp = _round_up(R, tr)

    x2d = x.reshape(R, L)
    x2d = jnp.pad(x2d, ((0, Rp - R), (0, Lp - L)))

    kernel = functools.partial(_feature_kernel, k=k, roll_sign=_roll_sign())

    ent2d, cont2d = pl.pallas_call(
        kernel,
        out_shape=(
            jax.ShapeDtypeStruct((Rp, Wp), x.dtype),
            jax.ShapeDtypeStruct((Rp, Wp), x.dtype),
        ),
        grid=(Rp // tr,),
        in_specs=[pl.BlockSpec((tr, Lp), lambda i: (i, 0))],
        out_specs=(
            pl.BlockSpec((tr, Wp), lambda i: (i, 0)),
            pl.BlockSpec((tr, Wp), lambda i: (i, 0)),
        ),
        compiler_params=pltpu.CompilerParams(
            dimension_semantics=("parallel",),    # independent row tiles
            vmem_limit_bytes=int(vmem_limit_bytes),
        ),
    )(x2d)

    ent = ent2d[:R, :W].reshape(B, C, W)
    cont = cont2d[:R, :W].reshape(B, C, W)
    return ent, cont


def _reference(x: jax.Array, k: int):
    """Pure-JAX reference mirroring the PyTorch module."""
    B, C, L = x.shape
    W = L - k + 1
    idx = jnp.arange(W)[:, None] + jnp.arange(k)[None, :]      # (W, k)
    temp = x[:, :, idx]                                        # (B, C, W, k)
    p = jax.nn.softmax(temp, axis=3)
    logp = jax.nn.log_softmax(temp, axis=3)
    entropy = jnp.mean(p * logp, axis=3)
    content = jnp.mean(temp, axis=3)
    return entropy, content


if __name__ == "__main__":
    key = jax.random.PRNGKey(0)
    B, C, L, K = 2, 4, 16, 4
    x = jax.random.normal(key, (B, C, L), dtype=jnp.float32)

    ent, cont = feature_forward(x, K)
    jax.block_until_ready((ent, cont))

    ent_ref, cont_ref = _reference(x, K)
    assert ent.shape == (B, C, L - K + 1) and cont.shape == (B, C, L - K + 1)
    # Newton-refined reciprocal -> tight tolerance on entropy as well.
    assert jnp.allclose(ent, ent_ref, atol=1e-4, rtol=1e-4)
    assert jnp.allclose(cont, cont_ref, atol=1e-5, rtol=1e-5)

    print("KERNEL_OK")
</pallas_src>

<mosaic_0001>
module attributes {stable_mosaic.version = 11 : i64} {
  func.func @probe(%arg0: memref<8x128xf32, #tpu.memory_space<vmem>>, %arg1: memref<8x128xf32, #tpu.memory_space<vmem>>) attributes {dimension_semantics = [], scalar_prefetch = 0 : i64, scratch_operands = 0 : i64, tpu.core_type = #tpu.core_type<tc>} {
    %c0 = arith.constant 0 : index
    %c0_0 = arith.constant 0 : index
    %0 = vector.load %arg0[%c0, %c0_0] : memref<8x128xf32, #tpu.memory_space<vmem>>, vector<8x128xf32>
    %c1_i32 = arith.constant 1 : i32
    %1 = tpu.dynamic_rotate %0 by %c1_i32 dim 1 : vector<8x128xf32>, i32 -> vector<8x128xf32>
    %c0_1 = arith.constant 0 : index
    %c0_2 = arith.constant 0 : index
    %2 = vector.load %arg1[%c0_1, %c0_2] : memref<8x128xf32, #tpu.memory_space<vmem>>, vector<8x128xf32>
    tpu.vector_store %arg1[%c0_1, %c0_2], %1 {strides = array<i32>} : memref<8x128xf32, #tpu.memory_space<vmem>>, vector<8x128xf32>,
    return
  }
}

</mosaic_0001>

<llo_original>
// kernel: tpu_custom_call.1
$region0: #{tpu_custom_call.1}
  #allocation0 [shape = 'u32[]', space=smem, size = 0x4, offset = 0x4, fixed_abs, tag = 'smem constant byte address 0x4 - core index']
  #allocation1 [shape = 'u32[72,128]{1,0:T(1,128)}', space=vmem, size = 0x9000, scoped, tag = 'internal scratch']
  %s0 = inlined_call_operand.hbm [shape: f32[8,128], index: 0, kind: input, shape index: {}]
  %s1 = inlined_call_operand.hbm [shape: f32[8,128], index: 1, kind: output, shape index: {}]
  %s2 = sld [smem:[#allocation0]]
  $region18: #{tpu_custom_call.1} parent=0
    _
  %s4 = ssub.s32 1, %s2
  %s5 = scalar_select 0, %s4, %s2
  $region1: #{tpu_custom_call.1} parent=0
    #allocation2 [shape = 'u8[4096]{0}', space=vmem, size = 0x1000, scoped, tag = 'input window, operand 0, single buffered']
    #allocation3 [shape = 's32[1]{0}', space=sflag, size = 0x4, scoped, tag = 'scoped memory for tpu_custom_call.1']
    #allocation4 [shape = 's32[1]{0}', space=sflag, size = 0x4, scoped, tag = 'scoped memory for tpu_custom_call.1']
    #allocation5 [shape = 'u8[4096]{0}', space=vmem, size = 0x1000, scoped, tag = 'output window, operand 0, single buffered']
    %6 = vsyncpa [#allocation3], 0
    %7 = vsyncpa [#allocation4], 0
    // Predicated region
    $region2: #{tpu_custom_call.1} parent=1 // pred_check
      _
    $region3: #{tpu_custom_call.1} parent=1 // pred_check_branch
      %9 = sbr.rel (0) target = $region5
    $region4: #{tpu_custom_call.1} parent=1 // pred_region
      %11 = vsyncadd [#allocation3], 0
      %s13 = sshll.u32 %s0, 4
      %s14 = int_to_ptr.hbm [resolvable:$true] %s13
      %s15 = sshll.u32 [#allocation2], 4
      %s16 = int_to_ptr.vmem [resolvable:$true] %s15
      %18 = dma.hbm_to_vmem [thread:$0]  %s14, 128, %s16, [#allocation3]
    $region5: #{tpu_custom_call.1} parent=1 // pred_fallthru
      _
    // Predicated region
    $region6: #{tpu_custom_call.1} parent=1 // pred_check
      _
    $region7: #{tpu_custom_call.1} parent=1 // pred_check_branch
      %20 = sbr.rel (0) target = $region9
    $region8: #{tpu_custom_call.1} parent=1 // pred_region
      %22 = dma.done [#allocation3], 128
    $region9: #{tpu_custom_call.1} parent=1 // pred_fallthru
      _
    %v23 = vld [vmem:[#allocation2] sm:$0xff]
    %24 = vrot.lane.b32.xlu0 %v23, 1
    %v25 = vpop.permute.xlu0 %24
    %26 = vst [vmem:[#allocation5] sm:$0xff] %v25
    // Predicated region
    $region10: #{tpu_custom_call.1} parent=1 // pred_check
      _
    $region11: #{tpu_custom_call.1} parent=1 // pred_check_branch
      %28 = sbr.rel (0) target = $region13
    $region12: #{tpu_custom_call.1} parent=1 // pred_region
      %30 = vsyncadd [#allocation4], 0
      %s32 = sshll.u32 [#allocation5], 4
      %s33 = int_to_ptr.vmem [resolvable:$true] %s32
      %s34 = sshll.u32 %s1, 4
      %s35 = int_to_ptr.hbm [resolvable:$true] %s34
      %37 = dma.vmem_to_hbm [thread:$0]  %s33, 128, %s35, [#allocation4]
    $region13: #{tpu_custom_call.1} parent=1 // pred_fallthru
      _
    // Predicated region
    $region14: #{tpu_custom_call.1} parent=1 // pred_check
      _
    $region15: #{tpu_custom_call.1} parent=1 // pred_check_branch
      %39 = sbr.rel (0) target = $region17
    $region16: #{tpu_custom_call.1} parent=1 // pred_region
      %41 = dma.done [#allocation4], 128
    $region17: #{tpu_custom_call.1} parent=1 // pred_fallthru
      _
    %42 = vsyncpa [#allocation3], 1
    %43 = vsyncpa [#allocation4], 1

</llo_original>
